<compile_context>
chip_gen: v5e
topology: v5e:2x2
jax: 0.10.0
libtpu: 0.0.40
codegen_flags: <defaults>
</compile_context>

<pallas_src>
import math
import warnings
from functools import partial

import jax
import jax.numpy as jnp
import numpy as np
from jax.experimental import pallas as pl
from jax.experimental.pallas import tpu as pltpu

# Donation should be consumed by the in/out aliasing; silence the benign
# warning if a backend declines it.
warnings.filterwarnings("ignore", message="Some donated buffers were not usable")

_TILE_BYTES = 2 * 1024 * 1024       # target per-tensor row-tile size (~2 MiB)
_VMEM_LIMIT = 32 * 1024 * 1024      # safe on v5e/v6e (128 MiB) and v7x (64 MiB)


def _identity2_kernel(c_ref, s_ref, c_out_ref, s_out_ref):
    # Whole tiles resident in VMEM; two vector copies are the entire op.
    c_out_ref[...] = c_ref[...]
    s_out_ref[...] = s_ref[...]


def _lane_dense_shape(n, last):
    """2-D (rows, cols) view of an n-element tensor.

    Prefers cols as a large multiple of 128 (lane-dense -> unmasked `vst`);
    falls back to (n // last, last) full-block layout otherwise.
    Returns (rows, cols, is_lane_dense)."""
    if n % 128 == 0:
        for cols in (1024, 512, 256, 128):
            if n % cols == 0:
                return n // cols, cols, True
    last = max(int(last), 1)
    return n // last, last, False


def _pick_num_tiles(rows_c, rows_s, bytes_c, bytes_s):
    """Shared row-tile count: divides both row counts, keeps per-tile sublane
    dims 8-aligned, and targets ~_TILE_BYTES per tensor per tile."""
    g = math.gcd(rows_c, rows_s)
    desired = max(1, -(-bytes_c // _TILE_BYTES), -(-bytes_s // _TILE_BYTES))
    divs = set()
    d = 1
    while d * d <= g:
        if g % d == 0:
            divs.add(d)
            divs.add(g // d)
        d += 1
    best = 1
    for cand in sorted(divs):
        if cand > 1 and ((rows_c // cand) % 8 or (rows_s // cand) % 8):
            continue  # would violate the (8, 128) block constraint
        best = cand
        if cand >= desired:
            break
    return best


def _fused_identity_copy(c_in, st_in):
    """Single fused pallas_call passing both tensors through unchanged."""
    c_shape, s_shape = c_in.shape, st_in.shape
    c_n, s_n = int(c_in.size), int(st_in.size)

    # Empty-tensor guard: skip the pallas_call entirely.
    if c_n == 0 or s_n == 0:
        return c_in, st_in

    rc, cc, c_dense = _lane_dense_shape(c_n, c_shape[-1] if c_in.ndim else 1)
    rs, cs, s_dense = _lane_dense_shape(s_n, s_shape[-1] if st_in.ndim else 1)

    if c_dense and s_dense:
        nt = _pick_num_tiles(rc, rs,
                             c_n * c_in.dtype.itemsize,
                             s_n * st_in.dtype.itemsize)
    else:
        # TODO(synk): full-array-block fallback (element count not a multiple
        # of 128) assumes the tensor fits in VMEM; fine for this module's use.
        nt = 1

    c2 = c_in.reshape(rc, cc)
    s2 = st_in.reshape(rs, cs)
    blk_c = (rc // nt, cc)
    blk_s = (rs // nt, cs)

    c_out2, s_out2 = pl.pallas_call(
        _identity2_kernel,
        out_shape=(jax.ShapeDtypeStruct((rc, cc), c2.dtype),
                   jax.ShapeDtypeStruct((rs, cs), s2.dtype)),
        grid_spec=pltpu.PrefetchScalarGridSpec(
            num_scalar_prefetch=0,
            grid=(nt,),
            in_specs=[pl.BlockSpec(blk_c, lambda i: (i, 0)),
                      pl.BlockSpec(blk_s, lambda i: (i, 0))],
            out_specs=[pl.BlockSpec(blk_c, lambda i: (i, 0)),
                       pl.BlockSpec(blk_s, lambda i: (i, 0))],
        ),
        compiler_params=pltpu.CompilerParams(
            dimension_semantics=("parallel",),      # v7x: shard tiles over 2 TCs
            vmem_limit_bytes=_VMEM_LIMIT,
        ),
        # Alias in->out so no new HBM output buffers are allocated when the
        # caller donates the inputs.
        input_output_aliases={0: 0, 1: 1},
    )(c2, s2)

    return c_out2.reshape(c_shape), s_out2.reshape(s_shape)


def lgff0_forward(c_in, st_in):
    """JAX equivalent of LGFF0.forward: a pure identity.

    The fastest correct implementation: return the inputs untouched
    (zero HBM traffic, zero kernel launches)."""
    return c_in, st_in


# Pallas pass-through path (kept for framework parity / validation).
# donate_argnums lets the in/out aliasing actually reuse the input buffers.
lgff0_forward_pallas = jax.jit(_fused_identity_copy, donate_argnums=(0, 1))


if __name__ == "__main__":
    key = jax.random.PRNGKey(0)
    k1, k2 = jax.random.split(key)

    # Small shapes consistent with the forward:
    #   c_in: conv-style NCHW feature map, st_in: sequence/state tensor.
    c_in = jax.random.normal(k1, (2, 4, 16, 16), dtype=jnp.float32)
    st_in = jax.random.normal(k2, (2, 8, 32), dtype=jnp.float32)

    # 1) The real module semantics: zero-copy identity.
    c0, st0 = lgff0_forward(c_in, st_in)
    assert c0 is c_in and st0 is st_in

    # 2) Pallas path (fused, lane-dense, aliased).  Inputs are donated, so
    #    snapshot them to host first for the correctness check.
    c_host = np.asarray(c_in)
    st_host = np.asarray(st_in)

    c1, st1 = lgff0_forward_pallas(c_in, st_in)
    jax.block_until_ready((c1, st1))

    assert c1.shape == c_host.shape and c1.dtype == c_host.dtype
    assert st1.shape == st_host.shape and st1.dtype == st_host.dtype
    assert np.array_equal(np.asarray(c1), c_host)
    assert np.array_equal(np.asarray(st1), st_host)

    print("KERNEL_OK")
</pallas_src>

<mosaic_0001>
module attributes {stable_mosaic.version = 11 : i64} {
  func.func @_identity2_kernel(%arg0: i32, %arg1: memref<2x1024xf32, #tpu.memory_space<vmem>>, %arg2: memref<1x512xf32, #tpu.memory_space<vmem>>, %arg3: memref<2x1024xf32, #tpu.memory_space<vmem>>, %arg4: memref<1x512xf32, #tpu.memory_space<vmem>>) attributes {dimension_semantics = [#tpu.dimension_semantics<parallel>], iteration_bounds = array<i64: 1>, scalar_prefetch = 0 : i64, scratch_operands = 0 : i64, tpu.core_type = #tpu.core_type<tc>, window_params = [{transform_indices = @transform_0, window_bounds = array<i64: 2, 1024>}, {transform_indices = @transform_1, window_bounds = array<i64: 1, 512>}, {transform_indices = @transform_2, window_bounds = array<i64: 2, 1024>}, {transform_indices = @transform_3, window_bounds = array<i64: 1, 512>}]} {
    %c0 = arith.constant 0 : index
    %c0_0 = arith.constant 0 : index
    %0 = vector.load %arg1[%c0, %c0_0] : memref<2x1024xf32, #tpu.memory_space<vmem>>, vector<2x1024xf32>
    %c0_1 = arith.constant 0 : index
    %c0_2 = arith.constant 0 : index
    %1 = vector.load %arg3[%c0_1, %c0_2] : memref<2x1024xf32, #tpu.memory_space<vmem>>, vector<2x1024xf32>
    tpu.vector_store %arg3[%c0_1, %c0_2], %0 {strides = array<i32>} : memref<2x1024xf32, #tpu.memory_space<vmem>>, vector<2x1024xf32>,
    %c0_3 = arith.constant 0 : index
    %c0_4 = arith.constant 0 : index
    %2 = vector.load %arg2[%c0_3, %c0_4] : memref<1x512xf32, #tpu.memory_space<vmem>>, vector<1x512xf32>
    %c0_5 = arith.constant 0 : index
    %c0_6 = arith.constant 0 : index
    %3 = vector.load %arg4[%c0_5, %c0_6] : memref<1x512xf32, #tpu.memory_space<vmem>>, vector<1x512xf32>
    tpu.vector_store %arg4[%c0_5, %c0_6], %2 {strides = array<i32>} : memref<1x512xf32, #tpu.memory_space<vmem>>, vector<1x512xf32>,
    return
  }
  func.func @transform_0(%arg0: i32) -> (i32, i32) {
    %c0_i32 = arith.constant 0 : i32
    %c0_i32_0 = arith.constant 0 : i32
    return %arg0, %c0_i32 : i32, i32
  }
  func.func @transform_1(%arg0: i32) -> (i32, i32) {
    %c0_i32 = arith.constant 0 : i32
    %c0_i32_0 = arith.constant 0 : i32
    return %arg0, %c0_i32 : i32, i32
  }
  func.func @transform_2(%arg0: i32) -> (i32, i32) {
    %c0_i32 = arith.constant 0 : i32
    %c0_i32_0 = arith.constant 0 : i32
    return %arg0, %c0_i32 : i32, i32
  }
  func.func @transform_3(%arg0: i32) -> (i32, i32) {
    %c0_i32 = arith.constant 0 : i32
    %c0_i32_0 = arith.constant 0 : i32
    return %arg0, %c0_i32 : i32, i32
  }
}

</mosaic_0001>

<llo_original>
// kernel: _fused_identity_copy.1
$region0: #{_fused_identity_copy.1}
  #allocation0 [shape = 'u32[]', space=smem, size = 0x4, offset = 0x4, fixed_abs, tag = 'smem constant byte address 0x4 - core index']
  #allocation1 [shape = 'u32[72,128]{1,0:T(1,128)}', space=vmem, size = 0x9000, scoped, tag = 'internal scratch']
  %s0 = inlined_call_operand.vmem [shape: f32[2,1024], index: 0, kind: input, shape index: {}, may-alias: {0,2}]
  %s1 = inlined_call_operand.vmem [shape: f32[1,512], index: 1, kind: input, shape index: {}, may-alias: {1,3}]
  %s2 = inlined_call_operand.vmem [shape: f32[2,1024], index: 2, kind: output, shape index: {0}, may-alias: {0,2}]
  %s3 = inlined_call_operand.vmem [shape: f32[1,512], index: 3, kind: output, shape index: {1}, may-alias: {1,3}]
  %4 = xla_tuple %s2, %s3
  %s5 = sld [smem:[#allocation0]]
  $region26: #{_fused_identity_copy.1} parent=0
    _
  %s7 = ssub.s32 1, %s5
  %s8 = scalar_select 0, %s7, %s5
  // Predicated region
  $region2: #{_fused_identity_copy.1} parent=0 // pred_check
    _
  $region3: #{_fused_identity_copy.1} parent=0 // pred_check_branch
    %10 = sbr.rel (0) target = $region5
  $region4: #{_fused_identity_copy.1} parent=0 // pred_region
    _
  $region5: #{_fused_identity_copy.1} parent=0 // pred_fallthru
    _
  // Predicated region
  $region6: #{_fused_identity_copy.1} parent=0 // pred_check
    _
  $region7: #{_fused_identity_copy.1} parent=0 // pred_check_branch
    %12 = sbr.rel (0) target = $region9
  $region8: #{_fused_identity_copy.1} parent=0 // pred_region
    _
  $region9: #{_fused_identity_copy.1} parent=0 // pred_fallthru
    _
  %v13 = vld [vmem:[%s0] sm:$0xff]
  %v14 = vld [vmem:[%s0 + $0x8] sm:$0xff]
  %15 = vst [vmem:[%s2] sm:$0xff] %v13
  %16 = vst [vmem:[%s2 + $0x8] sm:$0xff] %v14
  %v17 = vld [vmem:[%s1] sm:$0xf]
  %v18 = vlaneseq
  %vm19 = vcmp.ge.s32.totalorder %v18, 0
  %vm20 = vcmp.lt.s32.totalorder %v18, 512
  %vm21 = vmand %vm19, %vm20
  %22 = vst.msk [vmem:[%s3] sm:$0xf] %vm21, %v17
  // Predicated region
  $region10: #{_fused_identity_copy.1} parent=0 // pred_check
    _
  $region11: #{_fused_identity_copy.1} parent=0 // pred_check_branch
    %24 = sbr.rel (0) target = $region13
  $region12: #{_fused_identity_copy.1} parent=0 // pred_region
    _
  $region13: #{_fused_identity_copy.1} parent=0 // pred_fallthru
    _
  // Predicated region
  $region14: #{_fused_identity_copy.1} parent=0 // pred_check
    _
  $region15: #{_fused_identity_copy.1} parent=0 // pred_check_branch
    %26 = sbr.rel (0) target = $region17
  $region16: #{_fused_identity_copy.1} parent=0 // pred_region
    _
  $region17: #{_fused_identity_copy.1} parent=0 // pred_fallthru
    _
  // Predicated region
  $region18: #{_fused_identity_copy.1} parent=0 // pred_check
    _
  $region19: #{_fused_identity_copy.1} parent=0 // pred_check_branch
    %28 = sbr.rel (0) target = $region21
  $region20: #{_fused_identity_copy.1} parent=0 // pred_region
    _
  $region21: #{_fused_identity_copy.1} parent=0 // pred_fallthru
    _
  // Predicated region
  $region22: #{_fused_identity_copy.1} parent=0 // pred_check
    _
  $region23: #{_fused_identity_copy.1} parent=0 // pred_check_branch
    %30 = sbr.rel (0) target = $region25
  $region24: #{_fused_identity_copy.1} parent=0 // pred_region
    _
  $region25: #{_fused_identity_copy.1} parent=0 // pred_fallthru
    _

</llo_original>
